<compile_context>
chip_gen: v5e
topology: v5e:2x2
jax: 0.10.0
libtpu: 0.0.40
codegen_flags: <defaults>
</compile_context>

<pallas_src>
import jax
import jax.numpy as jnp
import numpy as np
from jax.experimental import pallas as pl
from jax.experimental.pallas import tpu as pltpu

# Small, deterministic config consistent with the module's __init__.
V = 64       # config.CharVocabSize
D = 32       # config.CharVectorsDim
H = 1024     # hidden width of content_fc (fixed by the module)
L = 10       # label_size = config.Label[config.UseLabel]
LP = 128     # lane-padded label width (output padded to full lane width)
S = 12       # sequence length
B = 8        # batch size (one BatchNorm batch; one grid step)

EPS = 1e-5   # nn.BatchNorm1d default eps


def fasttext_kernel(ids_ref, et1_ref, p_ref, w2_ref, out_ref):
    # counts[b, v] = #{s : ids[s, b] == v}  -- one-hot compare + adds (VPU only).
    ids = ids_ref[...]                                              # (S, B, 1) int32
    v_iota = jax.lax.broadcasted_iota(jnp.int32, (S, B, V), 2)
    counts = jnp.sum((ids == v_iota).astype(jnp.float32), axis=0)   # (B, V) f32

    # First layer, folded:  mean_s(emb[ids]) @ W1  ==  counts @ (emb_table @ W1)/S.
    # b1 is omitted: BatchNorm's batch-mean subtraction cancels it exactly.
    # counts are small exact integers -> lossless bf16 cast; ET1 is stored bf16.
    h = jnp.dot(counts.astype(jnp.bfloat16), et1_ref[...],
                preferred_element_type=jnp.float32)                 # (B, H) f32

    # BatchNorm1d(H): training-mode per-batch mean / biased variance (PyTorch
    # default).  The whole batch lives in this single grid step, so the batch
    # statistics are exact.  Kept in f32 (v5e has no bf16 VPU anyway).
    p = p_ref[...]                                    # (3, H) f32: [gamma; beta; b2 pad]
    mu = jnp.mean(h, axis=0, keepdims=True)
    var = jnp.mean((h - mu) ** 2, axis=0, keepdims=True)
    h = (h - mu) * jax.lax.rsqrt(var + EPS) * p[0:1, :] + p[1:2, :]

    # ReLU(inplace=True)
    h = jnp.maximum(h, 0.0)

    # Linear(H -> L), lane-padded to LP so the final store is unmasked.
    out_ref[...] = (jnp.dot(h.astype(jnp.bfloat16), w2_ref[...],
                            preferred_element_type=jnp.float32)
                    + p[2:3, :LP])


def prepare_params(emb_table, w1, gamma, beta, w2, b2, *, seq_len=S):
    """Parameter-only precompute.  Call ONCE per weight update and cache the
    result; the per-call forward consumes the prepacked arrays directly."""
    # Fold the sequence mean + first Linear into one (V, H) bf16 table.
    et1 = (jnp.dot(emb_table, w1) * (1.0 / seq_len)).astype(jnp.bfloat16)     # (V, H)
    # Lane-pad W2 to (H, LP) and store bf16.
    w2p = jnp.zeros((H, LP), jnp.bfloat16).at[:, :L].set(w2.astype(jnp.bfloat16))
    # Pack gamma / beta / (zero-padded) b2 into one f32 (3, H) slab.
    params = (jnp.zeros((3, H), jnp.float32)
              .at[0, :].set(gamma[0])
              .at[1, :].set(beta[0])
              .at[2, :L].set(b2[0]))
    return et1, params, w2p


@jax.jit
def fasttext_char_forward(ids_batches, et1, params, w2p):
    """ids_batches: (N, S, B) int32 -- N independent full batches of size B.
    Returns (N, B, L) logits.  Each grid step processes one whole batch, so
    training-mode BatchNorm statistics are exact per batch."""
    n = ids_batches.shape[0]
    ids3 = ids_batches.reshape(n * S, B, 1)   # only per-call host-side op (tiny)

    out = pl.pallas_call(
        fasttext_kernel,
        out_shape=jax.ShapeDtypeStruct((n * B, LP), jnp.float32),
        grid=(n,),
        in_specs=[
            pl.BlockSpec((S, B, 1), lambda i: (i, 0, 0)),   # ids of batch i
            pl.BlockSpec((V, H), lambda i: (0, 0)),         # ET1 (bf16), VMEM-resident
            pl.BlockSpec((3, H), lambda i: (0, 0)),         # packed gamma/beta/b2 (f32)
            pl.BlockSpec((H, LP), lambda i: (0, 0)),        # W2 (bf16, lane-padded)
        ],
        out_specs=pl.BlockSpec((B, LP), lambda i: (i, 0)),
        compiler_params=pltpu.CompilerParams(
            dimension_semantics=("parallel",)),             # v7x: shard batches over 2 TCs
    )(ids3, et1, params, w2p)
    return out.reshape(n, B, LP)[:, :, :L]


def reference_forward(ids, emb_table, w1, b1, gamma, beta, w2, b2):
    # Faithful PyTorch-style f32 reference (gather + permute + mean + full MLP,
    # including b1) for one batch of shape (S, B).
    emb = jnp.take(emb_table, ids, axis=0)                  # (S, B, D)
    x = jnp.mean(jnp.transpose(emb, (1, 0, 2)), axis=1)     # (B, D)
    h = x @ w1 + b1
    mu = jnp.mean(h, axis=0, keepdims=True)
    var = jnp.mean((h - mu) ** 2, axis=0, keepdims=True)
    h = (h - mu) / jnp.sqrt(var + EPS) * gamma + beta
    h = jnp.maximum(h, 0.0)
    return h @ w2 + b2


def reference_forward_quantized(ids, et1_bf16, gamma, beta, w2p_bf16, b2):
    # Mirrors the kernel's arithmetic (folded first layer, b1 dropped, bf16
    # weights, f32 accumulation) to validate the kernel implementation tightly.
    onehot = (ids[:, :, None] == jnp.arange(V, dtype=jnp.int32)[None, None, :])
    counts = jnp.sum(onehot.astype(jnp.float32), axis=0)                 # (B, V)
    h = jnp.dot(counts, et1_bf16.astype(jnp.float32))                    # (B, H)
    mu = jnp.mean(h, axis=0, keepdims=True)
    var = jnp.mean((h - mu) ** 2, axis=0, keepdims=True)
    h = (h - mu) * jax.lax.rsqrt(var + EPS) * gamma + beta
    h = jnp.maximum(h, 0.0)
    hq = h.astype(jnp.bfloat16).astype(jnp.float32)
    return jnp.dot(hq, w2p_bf16.astype(jnp.float32))[:, :L] + b2


if __name__ == "__main__":
    key = jax.random.PRNGKey(0)
    k_ids, k_emb, k_w1, k_b1, k_g, k_be, k_w2, k_b2 = jax.random.split(key, 8)

    N = 4  # number of independent batches processed by one kernel launch

    # Deterministic synthetic parameters (shapes from the module __init__).
    ids = jax.random.randint(k_ids, (N, S, B), 0, V, dtype=jnp.int32)
    emb_table = jax.random.normal(k_emb, (V, D), jnp.float32)          # CharEmbedding.weight
    w1 = jax.random.normal(k_w1, (D, H), jnp.float32) / np.sqrt(D)     # Linear(D, 1024)
    b1 = 0.01 * jax.random.normal(k_b1, (1, H), jnp.float32)
    gamma = 1.0 + 0.1 * jax.random.normal(k_g, (1, H), jnp.float32)    # BatchNorm1d.weight
    beta = 0.1 * jax.random.normal(k_be, (1, H), jnp.float32)          # BatchNorm1d.bias
    w2 = jax.random.normal(k_w2, (H, L), jnp.float32) / np.sqrt(H)     # Linear(1024, L)
    b2 = 0.01 * jax.random.normal(k_b2, (1, L), jnp.float32)

    # Parameter precompute: runs ONCE, outside the per-call path (review #1).
    et1, params, w2p = prepare_params(emb_table, w1, gamma, beta, w2, b2)
    et1, params, w2p = jax.block_until_ready((et1, params, w2p))

    out = fasttext_char_forward(ids, et1, params, w2p)
    out = jax.block_until_ready(out)
    out_np = np.asarray(out)                                           # (N, B, L)

    # Check 1 (tight): kernel vs a JAX reference using the SAME bf16-quantized
    # weights -- validates the kernel implementation itself.
    for n in range(N):
        ref_q = reference_forward_quantized(ids[n], et1, gamma, beta, w2p, b2)
        np.testing.assert_allclose(out_np[n], np.asarray(ref_q), rtol=2e-3, atol=1e-3)

    # Check 2 (looser, intentional): kernel vs the faithful f32 PyTorch-style
    # reference -- validates that the bf16 weight quantization (a deliberate
    # perf choice) stays within acceptable error at these shapes.
    for n in range(N):
        ref = reference_forward(ids[n], emb_table, w1, b1, gamma, beta, w2, b2)
        np.testing.assert_allclose(out_np[n], np.asarray(ref), rtol=5e-2, atol=5e-2)

    print("KERNEL_OK")
</pallas_src>

<mosaic_0001>
module attributes {stable_mosaic.version = 11 : i64} {
  func.func @fasttext_kernel(%arg0: i32, %arg1: memref<12x8x1xi32, #tpu.memory_space<vmem>>, %arg2: memref<64x1024xbf16, #tpu.memory_space<vmem>>, %arg3: memref<3x1024xf32, #tpu.memory_space<vmem>>, %arg4: memref<1024x128xbf16, #tpu.memory_space<vmem>>, %arg5: memref<8x128xf32, #tpu.memory_space<vmem>>) attributes {dimension_semantics = [#tpu.dimension_semantics<parallel>], iteration_bounds = array<i64: 4>, scalar_prefetch = 0 : i64, scratch_operands = 0 : i64, tpu.core_type = #tpu.core_type<tc>, window_params = [{transform_indices = @transform_0, window_bounds = array<i64: 12, 8, 1>}, {pipeline_mode = #tpu.pipeline_mode<synchronous>, transform_indices = @transform_1, window_bounds = array<i64: 64, 1024>}, {pipeline_mode = #tpu.pipeline_mode<synchronous>, transform_indices = @transform_2, window_bounds = array<i64: 3, 1024>}, {pipeline_mode = #tpu.pipeline_mode<synchronous>, transform_indices = @transform_3, window_bounds = array<i64: 1024, 128>}, {transform_indices = @transform_4, window_bounds = array<i64: 8, 128>}]} {
    %c0 = arith.constant 0 : index
    %c0_0 = arith.constant 0 : index
    %c0_1 = arith.constant 0 : index
    %0 = vector.load %arg1[%c0, %c0_0, %c0_1] : memref<12x8x1xi32, #tpu.memory_space<vmem>>, vector<12x8x1xi32>
    %1 = tpu.iota {dimensions = array<i32: 2>} : vector<12x8x64xi32>
    %2 = vector.broadcast %0 : vector<12x8x1xi32> to vector<12x8x64xi32>
    %3 = arith.cmpi eq, %2, %1 : vector<12x8x64xi32>
    %4 = arith.extui %3 : vector<12x8x64xi1> to vector<12x8x64xi32>
    %5 = arith.sitofp %4 : vector<12x8x64xi32> to vector<12x8x64xf32>
    %cst = arith.constant dense<0.000000e+00> : vector<8x64xf32>
    %6 = vector.multi_reduction <add>, %5, %cst [0] : vector<12x8x64xf32> to vector<8x64xf32>
    %7 = arith.truncf %6 : vector<8x64xf32> to vector<8x64xbf16>
    %c0_2 = arith.constant 0 : index
    %c0_3 = arith.constant 0 : index
    %8 = vector.load %arg2[%c0_2, %c0_3] : memref<64x1024xbf16, #tpu.memory_space<vmem>>, vector<64x1024xbf16>
    %cst_4 = arith.constant dense<0.000000e+00> : vector<8x1024xf32>
    %9 = tpu.matmul %7, %8, %cst_4 {dimension_numbers = #tpu.dot_dimension_numbers<[1], [0], [0], [1], [0, 0, 1, 1], [], []>} : vector<8x64xbf16>, vector<64x1024xbf16>, vector<8x1024xf32> -> vector<8x1024xf32>
    %c0_5 = arith.constant 0 : index
    %c0_6 = arith.constant 0 : index
    %10 = vector.load %arg3[%c0_5, %c0_6] : memref<3x1024xf32, #tpu.memory_space<vmem>>, vector<3x1024xf32>
    %cst_7 = arith.constant dense<0.000000e+00> : vector<1024xf32>
    %11 = vector.multi_reduction <add>, %9, %cst_7 [0] : vector<8x1024xf32> to vector<1024xf32>
    %12 = vector.shape_cast %11 : vector<1024xf32> to vector<1x1024xf32>
    %cst_8 = arith.constant 8.000000e+00 : f32
    %13 = vector.broadcast %cst_8 : f32 to vector<1x1024xf32>
    %14 = arith.divf %12, %13 : vector<1x1024xf32>
    %15 = vector.broadcast %14 : vector<1x1024xf32> to vector<8x1024xf32>
    %16 = arith.subf %9, %15 : vector<8x1024xf32>
    %17 = arith.mulf %16, %16 : vector<8x1024xf32>
    %cst_9 = arith.constant dense<0.000000e+00> : vector<1024xf32>
    %18 = vector.multi_reduction <add>, %17, %cst_9 [0] : vector<8x1024xf32> to vector<1024xf32>
    %19 = vector.shape_cast %18 : vector<1024xf32> to vector<1x1024xf32>
    %cst_10 = arith.constant 8.000000e+00 : f32
    %20 = vector.broadcast %cst_10 : f32 to vector<1x1024xf32>
    %21 = arith.divf %19, %20 : vector<1x1024xf32>
    %22 = vector.broadcast %14 : vector<1x1024xf32> to vector<8x1024xf32>
    %23 = arith.subf %9, %22 : vector<8x1024xf32>
    %cst_11 = arith.constant 9.99999974E-6 : f32
    %24 = vector.broadcast %cst_11 : f32 to vector<1x1024xf32>
    %25 = arith.addf %21, %24 : vector<1x1024xf32>
    %26 = math.rsqrt %25 : vector<1x1024xf32>
    %27 = vector.broadcast %26 : vector<1x1024xf32> to vector<8x1024xf32>
    %28 = arith.mulf %23, %27 : vector<8x1024xf32>
    %29 = vector.extract_strided_slice %10 {offsets = [0, 0], sizes = [1, 1024], strides = [1, 1]} : vector<3x1024xf32> to vector<1x1024xf32>
    %30 = vector.broadcast %29 : vector<1x1024xf32> to vector<8x1024xf32>
    %31 = arith.mulf %28, %30 : vector<8x1024xf32>
    %32 = vector.extract_strided_slice %10 {offsets = [1, 0], sizes = [1, 1024], strides = [1, 1]} : vector<3x1024xf32> to vector<1x1024xf32>
    %33 = vector.broadcast %32 : vector<1x1024xf32> to vector<8x1024xf32>
    %34 = arith.addf %31, %33 : vector<8x1024xf32>
    %cst_12 = arith.constant 0.000000e+00 : f32
    %35 = vector.broadcast %cst_12 : f32 to vector<8x1024xf32>
    %36 = arith.maximumf %34, %35 : vector<8x1024xf32>
    %37 = arith.truncf %36 : vector<8x1024xf32> to vector<8x1024xbf16>
    %c0_13 = arith.constant 0 : index
    %c0_14 = arith.constant 0 : index
    %38 = vector.load %arg4[%c0_13, %c0_14] : memref<1024x128xbf16, #tpu.memory_space<vmem>>, vector<1024x128xbf16>
    %cst_15 = arith.constant dense<0.000000e+00> : vector<8x128xf32>
    %39 = tpu.matmul %37, %38, %cst_15 {dimension_numbers = #tpu.dot_dimension_numbers<[1], [0], [0], [1], [0, 0, 1, 1], [], []>} : vector<8x1024xbf16>, vector<1024x128xbf16>, vector<8x128xf32> -> vector<8x128xf32>
    %40 = vector.extract_strided_slice %10 {offsets = [2, 0], sizes = [1, 128], strides = [1, 1]} : vector<3x1024xf32> to vector<1x128xf32>
    %41 = vector.broadcast %40 : vector<1x128xf32> to vector<8x128xf32>
    %42 = arith.addf %39, %41 : vector<8x128xf32>
    %c0_16 = arith.constant 0 : index
    %c0_17 = arith.constant 0 : index
    %43 = vector.load %arg5[%c0_16, %c0_17] : memref<8x128xf32, #tpu.memory_space<vmem>>, vector<8x128xf32>
    tpu.vector_store %arg5[%c0_16, %c0_17], %42 {strides = array<i32>} : memref<8x128xf32, #tpu.memory_space<vmem>>, vector<8x128xf32>,
    return
  }
  func.func @transform_0(%arg0: i32) -> (i32, i32, i32) {
    %c0_i32 = arith.constant 0 : i32
    %c0_i32_0 = arith.constant 0 : i32
    %c0_i32_1 = arith.constant 0 : i32
    return %arg0, %c0_i32, %c0_i32_0 : i32, i32, i32
  }
  func.func @transform_1(%arg0: i32) -> (i32, i32) {
    %c0_i32 = arith.constant 0 : i32
    %c0_i32_0 = arith.constant 0 : i32
    %c0_i32_1 = arith.constant 0 : i32
    return %c0_i32, %c0_i32_0 : i32, i32
  }
  func.func @transform_2(%arg0: i32) -> (i32, i32) {
    %c0_i32 = arith.constant 0 : i32
    %c0_i32_0 = arith.constant 0 : i32
    %c0_i32_1 = arith.constant 0 : i32
    return %c0_i32, %c0_i32_0 : i32, i32
  }
  func.func @transform_3(%arg0: i32) -> (i32, i32) {
    %c0_i32 = arith.constant 0 : i32
    %c0_i32_0 = arith.constant 0 : i32
    %c0_i32_1 = arith.constant 0 : i32
    return %c0_i32, %c0_i32_0 : i32, i32
  }
  func.func @transform_4(%arg0: i32) -> (i32, i32) {
    %c0_i32 = arith.constant 0 : i32
    %c0_i32_0 = arith.constant 0 : i32
    return %arg0, %c0_i32 : i32, i32
  }
}

</mosaic_0001>

<llo_original>
// kernel: fasttext_char_forward.1
$region0: #{fasttext_char_forward.1}
  #allocation0 [shape = 'u32[]', space=smem, size = 0x4, offset = 0x4, fixed_abs, tag = 'smem constant byte address 0x4 - core index']
  #allocation1 [shape = 'u32[72,128]{1,0:T(1,128)}', space=vmem, size = 0x9000, scoped, tag = 'internal scratch']
  %s0 = inlined_call_operand.vmem [shape: s32[48,8,1], index: 0, kind: input, shape index: {}]
  %s1 = inlined_call_operand.hbm [shape: bf16[64,1024], index: 1, kind: input, shape index: {}]
  %s2 = inlined_call_operand.vmem [shape: f32[3,1024], index: 2, kind: input, shape index: {}]
  %s3 = inlined_call_operand.vmem [shape: bf16[1024,128], index: 3, kind: input, shape index: {}]
  %s4 = inlined_call_operand.hbm [shape: f32[32,128], index: 4, kind: output, shape index: {}]
  %s5 = sld [smem:[#allocation0]]
  $region53: #{fasttext_char_forward.1} parent=0
    _
  %s7 = ssub.s32 1, %s5
  %s8 = scalar_select 0, %s7, %s5
  $region1: #{fasttext_char_forward.1} parent=0
    #allocation2 [shape = 'u8[131072]{0}', space=vmem, size = 0x20000, scoped, tag = 'input window, operand 1, single buffered']
    #allocation3 [shape = 's32[2]{0}', space=sflag, size = 0x8, scoped, tag = 'scoped memory for fasttext_char_forward.1']
    #allocation4 [shape = 's32[2]{0}', space=sflag, size = 0x8, scoped, tag = 'scoped memory for fasttext_char_forward.1']
    #allocation5 [shape = 'u8[8192]{0}', space=vmem, size = 0x2000, scoped, tag = 'output window, operand 0']
    %9 = vsyncpa [#allocation3], 0
    %10 = vsyncpa [#allocation4], 0
    %s11 = scalar_lea.sflag [#allocation4], 1
    %12 = vsyncpa %s11, 0
    loop: start=0, step=1, limit=6
    $region2: #{fasttext_char_forward.1} parent=1 // loop_pre_header
      _
    $region3: #{fasttext_char_forward.1} parent=1 // loop_header
      %s14 = sphi 0, %s18
      %p15 = scmp.ge.s32.totalorder %s14, 6
      %s24 = sphi 0, %s26
      %s27 = sphi 0, %s24
      %s28 = sphi 0, %s27
      %s44 = sphi 0, %s28
      %s48 = sphi 0, %s48
      %s50 = sphi 0, %s48
      %s51 = sphi 0, %s50
      %s65 = sphi 0, %s51
      %s69 = sphi 0, %s69
      %s71 = sphi 0, %s69
      %s72 = sphi 0, %s71
      %s86 = sphi 0, %s72
      %s90 = sphi 0, %s90
      %s92 = sphi 0, %s90
      %s93 = sphi 0, %s92
      %s107 = sphi 0, %s93
      %s113 = sphi 0, %s115
      %s116 = sphi 0, %s113
      %s117 = sphi 0, %s116
      %s133 = sphi 0, %s117
    $region4: #{fasttext_char_forward.1} parent=1 // loop_header_branch
      %17 = sbr.rel (%p15) target = $region8
    $region5: #{fasttext_char_forward.1} parent=1 // loop_body
      %s19 = ssub.s32 %s14, 1
      %s20 = ssub.s32 %s14, 2
      %s21 = sadd.s32 %s14, 1
      %s22 = ssub.s32 %s14, %s21
      %p23 = scmp.eq.s32.totalorder %s22, 0
      %s25 = sadd.s32 %s24, 1
      %s26 = scalar_select %p23, %s24, %s25
      %p29 = pneg %p23
      %p30 = scmp.eq.s32.totalorder %s14, 3
      %p31 = por %p29, %p30
      %p32 = scmp.ne.s32.totalorder %s24, %s27
      %p33 = scmp.eq.s32.totalorder %s14, 0
      %p34 = por %p32, %p33
      %p35 = scmp.ne.s32.totalorder %s24, %s27
      %p36 = scmp.eq.s32.totalorder %s19, 3
      %p37 = por %p35, %p36
      %p38 = scmp.ne.s32.totalorder %s27, %s28
      %p39 = scmp.eq.s32.totalorder %s19, 0
      %p40 = por %p38, %p39
      %p41 = scmp.ne.s32.totalorder %s27, %s28
      %p42 = scmp.eq.s32.totalorder %s20, 3
      %p43 = por %p41, %p42
      %p45 = scmp.ne.s32.totalorder %s28, %s44
      %p46 = scmp.eq.s32.totalorder %s20, 0
      %p47 = por %p45, %p46
      %s49 = sadd.s32 %s48, 1
      %p52 = scmp.eq.s32.totalorder %s14, 3
      %p53 = scmp.ne.s32.totalorder %s48, %s50
      %p54 = scmp.eq.s32.totalorder %s14, 0
      %p55 = por %p53, %p54
      %p56 = scmp.ne.s32.totalorder %s48, %s50
      %p57 = scmp.eq.s32.totalorder %s19, 3
      %p58 = por %p56, %p57
      %p59 = scmp.ne.s32.totalorder %s50, %s51
      %p60 = scmp.eq.s32.totalorder %s19, 0
      %p61 = por %p59, %p60
      %p62 = scmp.ne.s32.totalorder %s50, %s51
      %p63 = scmp.eq.s32.totalorder %s20, 3
      %p64 = por %p62, %p63
      %p66 = scmp.ne.s32.totalorder %s51, %s65
      %p67 = scmp.eq.s32.totalorder %s20, 0
      %p68 = por %p66, %p67
      %s70 = sadd.s32 %s69, 1
      %p73 = scmp.eq.s32.totalorder %s14, 3
      %p74 = scmp.ne.s32.totalorder %s69, %s71
      %p75 = scmp.eq.s32.totalorder %s14, 0
      %p76 = por %p74, %p75
      %p77 = scmp.ne.s32.totalorder %s69, %s71
      %p78 = scmp.eq.s32.totalorder %s19, 3
      %p79 = por %p77, %p78
      %p80 = scmp.ne.s32.totalorder %s71, %s72
      %p81 = scmp.eq.s32.totalorder %s19, 0
      %p82 = por %p80, %p81
      %p83 = scmp.ne.s32.totalorder %s71, %s72
      %p84 = scmp.eq.s32.totalorder %s20, 3
      %p85 = por %p83, %p84
      %p87 = scmp.ne.s32.totalorder %s72, %s86
      %p88 = scmp.eq.s32.totalorder %s20, 0
      %p89 = por %p87, %p88
      %s91 = sadd.s32 %s90, 1
      %p94 = scmp.eq.s32.totalorder %s14, 3
      %p95 = scmp.ne.s32.totalorder %s90, %s92
      %p96 = scmp.eq.s32.totalorder %s14, 0
      %p97 = por %p95, %p96
      %p98 = scmp.ne.s32.totalorder %s90, %s92
      %p99 = scmp.eq.s32.totalorder %s19, 3
      %p100 = por %p98, %p99
      %p101 = scmp.ne.s32.totalorder %s92, %s93
      %p102 = scmp.eq.s32.totalorder %s19, 0
      %p103 = por %p101, %p102
      %p104 = scmp.ne.s32.totalorder %s92, %s93
      %p105 = scmp.eq.s32.totalorder %s20, 3
      %p106 = por %p104, %p105
      %p108 = scmp.ne.s32.totalorder %s93, %s107
      %p109 = scmp.eq.s32.totalorder %s20, 0
      %p110 = por %p108, %p109
      %s111 = ssub.s32 %s14, %s21
      %p112 = scmp.eq.s32.totalorder %s111, 0
      %s114 = sadd.s32 %s113, 1
      %s115 = scalar_select %p112, %s113, %s114
      %p118 = pneg %p112
      %p119 = scmp.eq.s32.totalorder %s14, 3
      %p120 = por %p118, %p119
      %p121 = scmp.ne.s32.totalorder %s113, %s116
      %p122 = scmp.eq.s32.totalorder %s14, 0
      %p123 = por %p121, %p122
      %p124 = scmp.ne.s32.totalorder %s113, %s116
      %p125 = scmp.eq.s32.totalorder %s19, 3
      %p126 = por %p124, %p125
      %p127 = scmp.ne.s32.totalorder %s116, %s117
      %p128 = scmp.eq.s32.totalorder %s19, 0
      %p129 = por %p127, %p128
      %p130 = scmp.ne.s32.totalorder %s116, %s117
      %p131 = scmp.eq.s32.totalorder %s20, 3
      %p132 = por %p130, %p131
      %p134 = scmp.ne.s32.totalorder %s117, %s133
      %p135 = scmp.eq.s32.totalorder %s20, 0
      %p136 = por %p134, %p135
      %p137 = scmp.le.s32.totalorder 1, %s14
      %p138 = scmp.lt.s32.totalorder %s14, 5
      %p139 = pnand %p137, %p138
      %p140 = pneg %p139
      // Predicated region
      $region9: #{fasttext_char_forward.1} parent=5 // pred_check
        _
      $region10: #{fasttext_char_forward.1} parent=5 // pred_check_branch
        %142 = sbr.rel (%p139) target = $region12
      $region11: #{fasttext_char_forward.1} parent=5 // pred_region
        %s143 = ssub.s32 %s14, 1
        // Predicated region
        $region13: #{fasttext_char_forward.1} parent=11 // pred_check
          %p144 = pneg %p61
        $region14: #{fasttext_char_forward.1} parent=11 // pred_check_branch
          %146 = sbr.rel (%p144) target = $region16
        $region15: #{fasttext_char_forward.1} parent=11 // pred_region
          %148 = vsyncadd [#allocation3], 0
          %s149 = sshll.u32 %s1, 4
          %s150 = int_to_ptr.hbm [resolvable:$true] %s149
          %s151 = sshll.u32 [#allocation2], 4
          %s152 = int_to_ptr.vmem [resolvable:$true] %s151
          %157 = dma.hbm_to_vmem [thread:$0]  %s150, 4096, %s152, [#allocation3], 512, 512, 32
        $region16: #{fasttext_char_forward.1} parent=11 // pred_fallthru
          _
        // Predicated region
        $region17: #{fasttext_char_forward.1} parent=11 // pred_check
          %p158 = pneg %p82
        $region18: #{fasttext_char_forward.1} parent=11 // pred_check_branch
          %160 = sbr.rel (%p158) target = $region20
        $region19: #{fasttext_char_forward.1} parent=11 // pred_region
          _
        $region20: #{fasttext_char_forward.1} parent=11 // pred_fallthru
          _
        // Predicated region
        $region21: #{fasttext_char_forward.1} parent=11 // pred_check
          %p161 = pneg %p103
        $region22: #{fasttext_char_forward.1} parent=11 // pred_check_branch
          %163 = sbr.rel (%p161) target = $region24
        $region23: #{fasttext_char_forward.1} parent=11 // pred_region
          _
        $region24: #{fasttext_char_forward.1} parent=11 // pred_fallthru
          _
      $region12: #{fasttext_char_forward.1} parent=5 // pred_fallthru
        _
      %p164 = scmp.lt.s32.totalorder %s14, 4
      // Predicated region
      $region25: #{fasttext_char_forward.1} parent=5 // pred_check
        %p165 = pneg %p164
      $region26: #{fasttext_char_forward.1} parent=5 // pred_check_branch
        %167 = sbr.rel (%p165) target = $region28
      $region27: #{fasttext_char_forward.1} parent=5 // pred_region
        // Predicated region
        $region29: #{fasttext_char_forward.1} parent=27 // pred_check
          %p168 = pneg %p34
        $region30: #{fasttext_char_forward.1} parent=27 // pred_check_branch
          %170 = sbr.rel (%p168) target = $region32
        $region31: #{fasttext_char_forward.1} parent=27 // pred_region
          %s171 = smul.u32 12, %s14
          %p172 = scmp.lt.s32.totalorder %s171, 47
          %s173 = scalar_select %p172, %s171, 47
          %s174 = smul.addr %s173, 8
          %s175 = scalar_lea.vmem %s0, %s174
          %s176 = smul.u32 12, %s14
        $region32: #{fasttext_char_forward.1} parent=27 // pred_fallthru
          _
      $region28: #{fasttext_char_forward.1} parent=5 // pred_fallthru
        _
      %p177 = scmp.le.s32.totalorder 1, %s14
      %p178 = scmp.lt.s32.totalorder %s14, 5
      %p179 = pnand %p177, %p178
      %p180 = pneg %p179
      // Predicated region
      $region33: #{fasttext_char_forward.1} parent=5 // pred_check
        _
      $region34: #{fasttext_char_forward.1} parent=5 // pred_check_branch
        %182 = sbr.rel (%p179) target = $region36
      $region35: #{fasttext_char_forward.1} parent=5 // pred_region
        %s183 = ssub.s32 %s14, 1
        // Predicated region
        $region37: #{fasttext_char_forward.1} parent=35 // pred_check
          %p184 = pneg %p61
        $region38: #{fasttext_char_forward.1} parent=35 // pred_check_branch
          %186 = sbr.rel (%p184) target = $region40
        $region39: #{fasttext_char_forward.1} parent=35 // pred_region
          %188 = dma.done [#allocation3], 4096
        $region40: #{fasttext_char_forward.1} parent=35 // pred_fallthru
          _
        %s189 = smul.u32 12, %s19
        %p190 = scmp.lt.s32.totalorder %s189, 47
        %s191 = scalar_select %p190, %s189, 47
        %s192 = smul.addr %s191, 8
        %s193 = scalar_lea.vmem %s0, %s192
        %p194 = pneg %p40
        %p195 = pneg %p37
        %p196 = pneg %p61
        %p197 = pneg %p58
        %p198 = pneg %p82
        %p199 = pneg %p79
        %p200 = pneg %p103
        %p201 = pneg %p100
        %p202 = pneg %p129
        %p203 = pneg %p126
        %s204 = sand.u32 %s116, 1
        %s205 = scalar_lea.sflag [#allocation4], %s204
        %s206 = sand.u32 %s116, 1
        %s207 = smul.addr %s206, 8
        %s208 = scalar_lea.vmem [#allocation5], %s207
        %s209 = smul.u32 12, %s19
        %p210 = scmp.lt.s32.totalorder %s209, 47
        %s211 = scalar_select %p210, %s209, 47
        %s212 = smul.addr %s211, 8
        %s213 = scalar_lea.vmem %s0, %s212
        %s214 = smul.u32 12, %s19
        %v216 = vld [vmem:[%s213] sm:$0xff]
        %v217 = vld [vmem:[%s213 + $0x8] sm:$0xff]
        %v218 = vld [vmem:[%s213 + $0x10] sm:$0xff]
        %v219 = vld [vmem:[%s213 + $0x18] sm:$0xff]
        %v220 = vld [vmem:[%s213 + $0x20] sm:$0xff]
        %v221 = vld [vmem:[%s213 + $0x28] sm:$0xff]
        %v222 = vld [vmem:[%s213 + $0x30] sm:$0xff]
        %v223 = vld [vmem:[%s213 + $0x38] sm:$0xff]
        %v224 = vld [vmem:[%s213 + $0x40] sm:$0xff]
        %v225 = vld [vmem:[%s213 + $0x48] sm:$0xff]
        %v226 = vld [vmem:[%s213 + $0x50] sm:$0xff]
        %v227 = vld [vmem:[%s213 + $0x58] sm:$0xff]
        %v228 = vlaneseq
        %v229 = vand.u32 %v228, 127
        %230 = vset.pattern.permute.xlu0 0
        %231 = vperm.xlu0 %230, %v216
        %v232 = vpop.permute.xlu0 %231
        %233 = vset.pattern.permute.xlu0 0
        %234 = vperm.xlu0 %233, %v217
        %v235 = vpop.permute.xlu0 %234
        %236 = vset.pattern.permute.xlu0 0
        %237 = vperm.xlu0 %236, %v218
        %v238 = vpop.permute.xlu0 %237
        %239 = vset.pattern.permute.xlu0 0
        %240 = vperm.xlu0 %239, %v219
        %v241 = vpop.permute.xlu0 %240
        %242 = vset.pattern.permute.xlu0 0
        %243 = vperm.xlu0 %242, %v220
        %v244 = vpop.permute.xlu0 %243
        %245 = vset.pattern.permute.xlu0 0
        %246 = vperm.xlu0 %245, %v221
        %v247 = vpop.permute.xlu0 %246
        %248 = vset.pattern.permute.xlu0 0
        %249 = vperm.xlu0 %248, %v222
        %v250 = vpop.permute.xlu0 %249
        %251 = vset.pattern.permute.xlu0 0
        %252 = vperm.xlu0 %251, %v223
        %v253 = vpop.permute.xlu0 %252
        %254 = vset.pattern.permute.xlu0 0
        %255 = vperm.xlu0 %254, %v224
        %v256 = vpop.permute.xlu0 %255
        %257 = vset.pattern.permute.xlu0 0
        %258 = vperm.xlu0 %257, %v225
        %v259 = vpop.permute.xlu0 %258
        %260 = vset.pattern.permute.xlu0 0
        %261 = vperm.xlu0 %260, %v226
        %v262 = vpop.permute.xlu0 %261
        %263 = vset.pattern.permute.xlu0 0
        %264 = vperm.xlu0 %263, %v227
        %v265 = vpop.permute.xlu0 %264
        %vm266 = vcmp.eq.s32.totalorder %v232, %v229
        %vm267 = vcmp.eq.s32.totalorder %v235, %v229
        %vm268 = vcmp.eq.s32.totalorder %v238, %v229
        %vm269 = vcmp.eq.s32.totalorder %v241, %v229
        %vm270 = vcmp.eq.s32.totalorder %v244, %v229
        %vm271 = vcmp.eq.s32.totalorder %v247, %v229
        %vm272 = vcmp.eq.s32.totalorder %v250, %v229
        %vm273 = vcmp.eq.s32.totalorder %v253, %v229
        %vm274 = vcmp.eq.s32.totalorder %v256, %v229
        %vm275 = vcmp.eq.s32.totalorder %v259, %v229
        %vm276 = vcmp.eq.s32.totalorder %v262, %v229
        %vm277 = vcmp.eq.s32.totalorder %v265, %v229
        %v278 = vsel %vm266, 1, 0
        %v279 = vsel %vm267, 1, 0
        %v280 = vsel %vm268, 1, 0
        %v281 = vsel %vm269, 1, 0
        %v282 = vsel %vm270, 1, 0
        %v283 = vsel %vm271, 1, 0
        %v284 = vsel %vm272, 1, 0
        %v285 = vsel %vm273, 1, 0
        %v286 = vsel %vm274, 1, 0
        %v287 = vsel %vm275, 1, 0
        %v288 = vsel %vm276, 1, 0
        %v289 = vsel %vm277, 1, 0
        %v290 = vcvt.s32.f32 %v278
        %v291 = vcvt.s32.f32 %v279
        %v292 = vcvt.s32.f32 %v280
        %v293 = vcvt.s32.f32 %v281
        %v294 = vcvt.s32.f32 %v282
        %v295 = vcvt.s32.f32 %v283
        %v296 = vcvt.s32.f32 %v284
        %v297 = vcvt.s32.f32 %v285
        %v298 = vcvt.s32.f32 %v286
        %v299 = vcvt.s32.f32 %v287
        %v300 = vcvt.s32.f32 %v288
        %v301 = vcvt.s32.f32 %v289
        %vm302 = vcmask 523264
        %v303 = vsel %vm302, %v290, 0.0
        %v304 = vsel %vm302, %v291, 0.0
        %v305 = vadd.f32 %v303, %v304
        %v306 = vsel %vm302, %v292, 0.0
        %v307 = vadd.f32 %v305, %v306
        %v308 = vsel %vm302, %v293, 0.0
        %v309 = vadd.f32 %v307, %v308
        %v310 = vsel %vm302, %v294, 0.0
        %v311 = vadd.f32 %v309, %v310
        %v312 = vsel %vm302, %v295, 0.0
        %v313 = vadd.f32 %v311, %v312
        %v314 = vsel %vm302, %v296, 0.0
        %v315 = vadd.f32 %v313, %v314
        %v316 = vsel %vm302, %v297, 0.0
        %v317 = vadd.f32 %v315, %v316
        %v318 = vsel %vm302, %v298, 0.0
        %v319 = vadd.f32 %v317, %v318
        %v320 = vsel %vm302, %v299, 0.0
        %v321 = vadd.f32 %v319, %v320
        %v322 = vsel %vm302, %v300, 0.0
        %v323 = vadd.f32 %v321, %v322
        %v324 = vsel %vm302, %v301, 0.0
        %v325 = vadd.f32 %v323, %v324
        %v326 = vpack.c.bf16 %v325, %v325
        %v327 = vld [vmem:[#allocation2] sm:$0xff]
        %v328 = vld [vmem:[#allocation2 + $0x8] sm:$0xff]
        %v329 = vld [vmem:[#allocation2 + $0x10] sm:$0xff]
        %v330 = vld [vmem:[#allocation2 + $0x18] sm:$0xff]
        %v331 = vld [vmem:[#allocation2 + $0x20] sm:$0xff]
        %v332 = vld [vmem:[#allocation2 + $0x28] sm:$0xff]
        %v333 = vld [vmem:[#allocation2 + $0x30] sm:$0xff]
        %v334 = vld [vmem:[#allocation2 + $0x38] sm:$0xff]
        %v335 = vld [vmem:[#allocation2 + $0x40] sm:$0xff]
        %v336 = vld [vmem:[#allocation2 + $0x48] sm:$0xff]
        %v337 = vld [vmem:[#allocation2 + $0x50] sm:$0xff]
        %v338 = vld [vmem:[#allocation2 + $0x58] sm:$0xff]
        %v339 = vld [vmem:[#allocation2 + $0x60] sm:$0xff]
        %v340 = vld [vmem:[#allocation2 + $0x68] sm:$0xff]
        %v341 = vld [vmem:[#allocation2 + $0x70] sm:$0xff]
        %v342 = vld [vmem:[#allocation2 + $0x78] sm:$0xff]
        %v343 = vld [vmem:[#allocation2 + $0x80] sm:$0xff]
        %v344 = vld [vmem:[#allocation2 + $0x88] sm:$0xff]
        %v345 = vld [vmem:[#allocation2 + $0x90] sm:$0xff]
        %v346 = vld [vmem:[#allocation2 + $0x98] sm:$0xff]
        %v347 = vld [vmem:[#allocation2 + $0xa0] sm:$0xff]
        %v348 = vld [vmem:[#allocation2 + $0xa8] sm:$0xff]
        %v349 = vld [vmem:[#allocation2 + $0xb0] sm:$0xff]
        %v350 = vld [vmem:[#allocation2 + $0xb8] sm:$0xff]
        %v351 = vld [vmem:[#allocation2 + $0xc0] sm:$0xff]
        %v352 = vld [vmem:[#allocation2 + $0xc8] sm:$0xff]
        %v353 = vld [vmem:[#allocation2 + $0xd0] sm:$0xff]
        %v354 = vld [vmem:[#allocation2 + $0xd8] sm:$0xff]
        %v355 = vld [vmem:[#allocation2 + $0xe0] sm:$0xff]
        %v356 = vld [vmem:[#allocation2 + $0xe8] sm:$0xff]
        %v357 = vld [vmem:[#allocation2 + $0xf0] sm:$0xff]
        %v358 = vld [vmem:[#allocation2 + $0xf8] sm:$0xff]
        %v391 = vunpack.c.l.b16 %v327
        %v392 = vunpack.c.h.b16 %v327
        %v393 = vunpack.c.l.b16 %v328
        %v394 = vunpack.c.h.b16 %v328
        %v395 = vunpack.c.l.b16 %v329
        %v396 = vunpack.c.h.b16 %v329
        %v397 = vunpack.c.l.b16 %v330
        %v398 = vunpack.c.h.b16 %v330
        %v399 = vunpack.c.l.b16 %v331
        %v400 = vunpack.c.h.b16 %v331
        %v401 = vunpack.c.l.b16 %v332
        %v402 = vunpack.c.h.b16 %v332
        %v403 = vunpack.c.l.b16 %v333
        %v404 = vunpack.c.h.b16 %v333
        %v405 = vunpack.c.l.b16 %v334
        %v406 = vunpack.c.h.b16 %v334
        %v407 = vunpack.c.l.b16 %v335
        %v408 = vunpack.c.h.b16 %v335
        %v409 = vunpack.c.l.b16 %v336
        %v410 = vunpack.c.h.b16 %v336
        %v411 = vunpack.c.l.b16 %v337
        %v412 = vunpack.c.h.b16 %v337
        %v413 = vunpack.c.l.b16 %v338
        %v414 = vunpack.c.h.b16 %v338
        %v415 = vunpack.c.l.b16 %v339
        %v416 = vunpack.c.h.b16 %v339
        %v417 = vunpack.c.l.b16 %v340
        %v418 = vunpack.c.h.b16 %v340
        %v419 = vunpack.c.l.b16 %v341
        %v420 = vunpack.c.h.b16 %v341
        %v421 = vunpack.c.l.b16 %v342
        %v422 = vunpack.c.h.b16 %v342
        %v423 = vunpack.c.l.b16 %v343
        %v424 = vunpack.c.h.b16 %v343
        %v425 = vunpack.c.l.b16 %v344
        %v426 = vunpack.c.h.b16 %v344
        %v427 = vunpack.c.l.b16 %v345
        %v428 = vunpack.c.h.b16 %v345
        %v429 = vunpack.c.l.b16 %v346
        %v430 = vunpack.c.h.b16 %v346
        %v431 = vunpack.c.l.b16 %v347
        %v432 = vunpack.c.h.b16 %v347
        %v433 = vunpack.c.l.b16 %v348
        %v434 = vunpack.c.h.b16 %v348
        %v435 = vunpack.c.l.b16 %v349
        %v436 = vunpack.c.h.b16 %v349
        %v437 = vunpack.c.l.b16 %v350
        %v438 = vunpack.c.h.b16 %v350
        %v439 = vunpack.c.l.b16 %v351
        %v440 = vunpack.c.h.b16 %v351
        %v441 = vunpack.c.l.b16 %v352
        %v442 = vunpack.c.h.b16 %v352
        %v443 = vunpack.c.l.b16 %v353
        %v444 = vunpack.c.h.b16 %v353
        %v445 = vunpack.c.l.b16 %v354
        %v446 = vunpack.c.h.b16 %v354
        %v447 = vunpack.c.l.b16 %v355
        %v448 = vunpack.c.h.b16 %v355
        %v449 = vunpack.c.l.b16 %v356
        %v450 = vunpack.c.h.b16 %v356
        %v451 = vunpack.c.l.b16 %v357
        %v452 = vunpack.c.h.b16 %v357
        %v453 = vunpack.c.l.b16 %v358
        %v454 = vunpack.c.h.b16 %v358
        %v455 = vpack.c.b16 %v399, %v391
        %v456 = vpack.c.b16 %v400, %v392
        %v457 = vpack.c.b16 %v401, %v393
        %v458 = vpack.c.b16 %v402, %v394
        %v459 = vpack.c.b16 %v403, %v395
        %v460 = vpack.c.b16 %v404, %v396
        %v461 = vpack.c.b16 %v405, %v397
        %v462 = vpack.c.b16 %v406, %v398
        %v463 = vpack.c.b16 %v415, %v407
        %v464 = vpack.c.b16 %v416, %v408
        %v465 = vpack.c.b16 %v417, %v409
        %v466 = vpack.c.b16 %v418, %v410
        %v467 = vpack.c.b16 %v419, %v411
        %v468 = vpack.c.b16 %v420, %v412
        %v469 = vpack.c.b16 %v421, %v413
        %v470 = vpack.c.b16 %v422, %v414
        %v471 = vpack.c.b16 %v431, %v423
        %v472 = vpack.c.b16 %v432, %v424
        %v473 = vpack.c.b16 %v433, %v425
        %v474 = vpack.c.b16 %v434, %v426
        %v475 = vpack.c.b16 %v435, %v427
        %v476 = vpack.c.b16 %v436, %v428
        %v477 = vpack.c.b16 %v437, %v429
        %v478 = vpack.c.b16 %v438, %v430
        %v479 = vpack.c.b16 %v447, %v439
        %v480 = vpack.c.b16 %v448, %v440
        %v481 = vpack.c.b16 %v449, %v441
        %v482 = vpack.c.b16 %v450, %v442
        %v483 = vpack.c.b16 %v451, %v443
        %v484 = vpack.c.b16 %v452, %v444
        %v485 = vpack.c.b16 %v453, %v445
        %v486 = vpack.c.b16 %v454, %v446
        %v520 = vsel %vm302, %v326, 0
        %522 = vmatpush.bf16.msra.mxu0 0
        %523 = vmatpush.bf16.msra.mxu0 0
        %524 = vmatpush.bf16.msra.mxu0 0
        %525 = vmatpush.bf16.msra.mxu0 0
        %526 = vmatpush.bf16.msra.mxu0 %v479
        %527 = vmatpush.bf16.msra.mxu0 %v471
        %528 = vmatpush.bf16.msra.mxu0 %v463
        %529 = vmatpush.bf16.msra.mxu0 %v455
        %530 = vmatmul.bf16.gmra.mxu0 %v520
        %v531 = vpop.f32.mrf.mxu0
        %v532 = vadd.f32 0.0, %v531
        %v533 = vpop.f32.mrf.mxu0
        %534 = vdwg.mxu0
        %535 = vmatpush.bf16.msra.mxu0 0
        %536 = vmatpush.bf16.msra.mxu0 0
        %537 = vmatpush.bf16.msra.mxu0 0
        %538 = vmatpush.bf16.msra.mxu0 0
        %539 = vmatpush.bf16.msra.mxu0 %v480
        %540 = vmatpush.bf16.msra.mxu0 %v472
        %541 = vmatpush.bf16.msra.mxu0 %v464
        %542 = vmatpush.bf16.msra.mxu0 %v456
        %543 = vmatmul.bf16.gmra.mxu0 %v520
        %v544 = vpop.f32.mrf.mxu0
        %v545 = vadd.f32 0.0, %v544
        %v546 = vpop.f32.mrf.mxu0
        %547 = vdwg.mxu0
        %548 = vmatpush.bf16.msra.mxu0 0
        %549 = vmatpush.bf16.msra.mxu0 0
        %550 = vmatpush.bf16.msra.mxu0 0
        %551 = vmatpush.bf16.msra.mxu0 0
        %552 = vmatpush.bf16.msra.mxu0 %v481
        %553 = vmatpush.bf16.msra.mxu0 %v473
        %554 = vmatpush.bf16.msra.mxu0 %v465
        %555 = vmatpush.bf16.msra.mxu0 %v457
        %556 = vmatmul.bf16.gmra.mxu0 %v520
        %v557 = vpop.f32.mrf.mxu0
        %v558 = vadd.f32 0.0, %v557
        %v559 = vpop.f32.mrf.mxu0
        %560 = vdwg.mxu0
        %561 = vmatpush.bf16.msra.mxu0 0
        %562 = vmatpush.bf16.msra.mxu0 0
        %563 = vmatpush.bf16.msra.mxu0 0
        %564 = vmatpush.bf16.msra.mxu0 0
        %565 = vmatpush.bf16.msra.mxu0 %v482
        %566 = vmatpush.bf16.msra.mxu0 %v474
        %567 = vmatpush.bf16.msra.mxu0 %v466
        %568 = vmatpush.bf16.msra.mxu0 %v458
        %569 = vmatmul.bf16.gmra.mxu0 %v520
        %v570 = vpop.f32.mrf.mxu0
        %v571 = vadd.f32 0.0, %v570
        %v572 = vpop.f32.mrf.mxu0
        %573 = vdwg.mxu0
        %574 = vmatpush.bf16.msra.mxu0 0
        %575 = vmatpush.bf16.msra.mxu0 0
        %576 = vmatpush.bf16.msra.mxu0 0
        %577 = vmatpush.bf16.msra.mxu0 0
        %578 = vmatpush.bf16.msra.mxu0 %v483
        %579 = vmatpush.bf16.msra.mxu0 %v475
        %580 = vmatpush.bf16.msra.mxu0 %v467
        %581 = vmatpush.bf16.msra.mxu0 %v459
        %582 = vmatmul.bf16.gmra.mxu0 %v520
        %v583 = vpop.f32.mrf.mxu0
        %v584 = vadd.f32 0.0, %v583
        %v585 = vpop.f32.mrf.mxu0
        %586 = vdwg.mxu0
        %587 = vmatpush.bf16.msra.mxu0 0
        %588 = vmatpush.bf16.msra.mxu0 0
        %589 = vmatpush.bf16.msra.mxu0 0
        %590 = vmatpush.bf16.msra.mxu0 0
        %591 = vmatpush.bf16.msra.mxu0 %v484
        %592 = vmatpush.bf16.msra.mxu0 %v476
        %593 = vmatpush.bf16.msra.mxu0 %v468
        %594 = vmatpush.bf16.msra.mxu0 %v460
        %595 = vmatmul.bf16.gmra.mxu0 %v520
        %v596 = vpop.f32.mrf.mxu0
        %v597 = vadd.f32 0.0, %v596
        %v598 = vpop.f32.mrf.mxu0
        %599 = vdwg.mxu0
        %600 = vmatpush.bf16.msra.mxu0 0
        %601 = vmatpush.bf16.msra.mxu0 0
        %602 = vmatpush.bf16.msra.mxu0 0
        %603 = vmatpush.bf16.msra.mxu0 0
        %604 = vmatpush.bf16.msra.mxu0 %v485
        %605 = vmatpush.bf16.msra.mxu0 %v477
        %606 = vmatpush.bf16.msra.mxu0 %v469
        %607 = vmatpush.bf16.msra.mxu0 %v461
        %608 = vmatmul.bf16.gmra.mxu0 %v520
        %v609 = vpop.f32.mrf.mxu0
        %v610 = vadd.f32 0.0, %v609
        %v611 = vpop.f32.mrf.mxu0
        %612 = vdwg.mxu0
        %613 = vmatpush.bf16.msra.mxu0 0
        %614 = vmatpush.bf16.msra.mxu0 0
        %615 = vmatpush.bf16.msra.mxu0 0
        %616 = vmatpush.bf16.msra.mxu0 0
        %617 = vmatpush.bf16.msra.mxu0 %v486
        %618 = vmatpush.bf16.msra.mxu0 %v478
        %619 = vmatpush.bf16.msra.mxu0 %v470
        %620 = vmatpush.bf16.msra.mxu0 %v462
        %621 = vmatmul.bf16.gmra.mxu0 %v520
        %v622 = vpop.f32.mrf.mxu0
        %v623 = vadd.f32 0.0, %v622
        %v624 = vpop.f32.mrf.mxu0
        %625 = vdwg.mxu0
        %v626 = vld [vmem:[%s2] sm:$0x77]
        %v627 = vld [vmem:[%s2 + $0x8] sm:$0x77]
        %v628 = vld [vmem:[%s2 + $0x10] sm:$0x77]
        %v629 = vld [vmem:[%s2 + $0x18] sm:$0x77]
        %v630 = vrot.slane %v532, 4
        %v631 = vadd.f32 %v532, %v630
        %v632 = vrot.slane %v631, 2
        %v633 = vadd.f32 %v631, %v632
        %v634 = vrot.slane %v633, 1
        %v635 = vadd.f32 %v633, %v634
        %v636 = vrot.slane %v545, 4
        %v637 = vadd.f32 %v545, %v636
        %v638 = vrot.slane %v637, 2
        %v639 = vadd.f32 %v637, %v638
        %v640 = vrot.slane %v639, 1
        %v641 = vadd.f32 %v639, %v640
        %v642 = vrot.slane %v558, 4
        %v643 = vadd.f32 %v558, %v642
        %v644 = vrot.slane %v643, 2
        %v645 = vadd.f32 %v643, %v644
        %v646 = vrot.slane %v645, 1
        %v647 = vadd.f32 %v645, %v646
        %v648 = vrot.slane %v571, 4
        %v649 = vadd.f32 %v571, %v648
        %v650 = vrot.slane %v649, 2
        %v651 = vadd.f32 %v649, %v650
        %v652 = vrot.slane %v651, 1
        %v653 = vadd.f32 %v651, %v652
        %v654 = vrot.slane %v584, 4
        %v655 = vadd.f32 %v584, %v654
        %v656 = vrot.slane %v655, 2
        %v657 = vadd.f32 %v655, %v656
        %v658 = vrot.slane %v657, 1
        %v659 = vadd.f32 %v657, %v658
        %v660 = vrot.slane %v597, 4
        %v661 = vadd.f32 %v597, %v660
        %v662 = vrot.slane %v661, 2
        %v663 = vadd.f32 %v661, %v662
        %v664 = vrot.slane %v663, 1
        %v665 = vadd.f32 %v663, %v664
        %v666 = vrot.slane %v610, 4
        %v667 = vadd.f32 %v610, %v666
        %v668 = vrot.slane %v667, 2
        %v669 = vadd.f32 %v667, %v668
        %v670 = vrot.slane %v669, 1
        %v671 = vadd.f32 %v669, %v670
        %v672 = vrot.slane %v623, 4
        %v673 = vadd.f32 %v623, %v672
        %v674 = vrot.slane %v673, 2
        %v675 = vadd.f32 %v673, %v674
        %v676 = vrot.slane %v675, 1
        %v677 = vadd.f32 %v675, %v676
        %v678 = vrcp.pop 8.0
        %v679 = vmul.f32 8.0, %v678
        %v680 = vsub.f32 1.0, %v679
        %v681 = vmul.f32 %v678, %v680
        %v682 = vadd.f32 %v678, %v681
        %vm683 = vweird.f32 %v678
        %v684 = vsel %vm683, %v678, %v682
        %v685 = vmul.f32 %v635, %v684
        %v686 = vmul.f32 %v641, %v684
        %v687 = vmul.f32 %v647, %v684
        %v688 = vmul.f32 %v653, %v684
        %v689 = vmul.f32 %v659, %v684
        %v690 = vmul.f32 %v665, %v684
        %v691 = vmul.f32 %v671, %v684
        %v692 = vmul.f32 %v677, %v684
        %v693 = vsub.f32 %v532, %v685
        %v694 = vsub.f32 %v545, %v686
        %v695 = vsub.f32 %v558, %v687
        %v696 = vsub.f32 %v571, %v688
        %v697 = vsub.f32 %v584, %v689
        %v698 = vsub.f32 %v597, %v690
        %v699 = vsub.f32 %v610, %v691
        %v700 = vsub.f32 %v623, %v692
        %v701 = vmul.f32 %v693, %v693
        %v702 = vmul.f32 %v694, %v694
        %v703 = vmul.f32 %v695, %v695
        %v704 = vmul.f32 %v696, %v696
        %v705 = vmul.f32 %v697, %v697
        %v706 = vmul.f32 %v698, %v698
        %v707 = vmul.f32 %v699, %v699
        %v708 = vmul.f32 %v700, %v700
        %v709 = vrot.slane %v701, 4
        %v710 = vadd.f32 %v701, %v709
        %v711 = vrot.slane %v710, 2
        %v712 = vadd.f32 %v710, %v711
        %v713 = vrot.slane %v712, 1
        %v714 = vadd.f32 %v712, %v713
        %v715 = vrot.slane %v702, 4
        %v716 = vadd.f32 %v702, %v715
        %v717 = vrot.slane %v716, 2
        %v718 = vadd.f32 %v716, %v717
        %v719 = vrot.slane %v718, 1
        %v720 = vadd.f32 %v718, %v719
        %v721 = vrot.slane %v703, 4
        %v722 = vadd.f32 %v703, %v721
        %v723 = vrot.slane %v722, 2
        %v724 = vadd.f32 %v722, %v723
        %v725 = vrot.slane %v724, 1
        %v726 = vadd.f32 %v724, %v725
        %v727 = vrot.slane %v704, 4
        %v728 = vadd.f32 %v704, %v727
        %v729 = vrot.slane %v728, 2
        %v730 = vadd.f32 %v728, %v729
        %v731 = vrot.slane %v730, 1
        %v732 = vadd.f32 %v730, %v731
        %v733 = vrot.slane %v705, 4
        %v734 = vadd.f32 %v705, %v733
        %v735 = vrot.slane %v734, 2
        %v736 = vadd.f32 %v734, %v735
        %v737 = vrot.slane %v736, 1
        %v738 = vadd.f32 %v736, %v737
        %v739 = vrot.slane %v706, 4
        %v740 = vadd.f32 %v706, %v739
        %v741 = vrot.slane %v740, 2
        %v742 = vadd.f32 %v740, %v741
        %v743 = vrot.slane %v742, 1
        %v744 = vadd.f32 %v742, %v743
        %v745 = vrot.slane %v707, 4
        %v746 = vadd.f32 %v707, %v745
        %v747 = vrot.slane %v746, 2
        %v748 = vadd.f32 %v746, %v747
        %v749 = vrot.slane %v748, 1
        %v750 = vadd.f32 %v748, %v749
        %v751 = vrot.slane %v708, 4
        %v752 = vadd.f32 %v708, %v751
        %v753 = vrot.slane %v752, 2
        %v754 = vadd.f32 %v752, %v753
        %v755 = vrot.slane %v754, 1
        %v756 = vadd.f32 %v754, %v755
        %v757 = vmul.f32 %v714, %v684
        %v758 = vmul.f32 %v720, %v684
        %v759 = vmul.f32 %v726, %v684
        %v760 = vmul.f32 %v732, %v684
        %v761 = vmul.f32 %v738, %v684
        %v762 = vmul.f32 %v744, %v684
        %v763 = vmul.f32 %v750, %v684
        %v764 = vmul.f32 %v756, %v684
        %v765 = vadd.f32 %v757, 1e-05
        %v766 = vadd.f32 %v758, 1e-05
        %v767 = vadd.f32 %v759, 1e-05
        %v768 = vadd.f32 %v760, 1e-05
        %v769 = vadd.f32 %v761, 1e-05
        %v770 = vadd.f32 %v762, 1e-05
        %v771 = vadd.f32 %v763, 1e-05
        %v772 = vadd.f32 %v764, 1e-05
        %v773 = vrsqrt.pop %v765
        %v774 = vmul.f32 %v773, %v765
        %v775 = vmul.f32 %v774, %v773
        %v776 = vmul.f32 0.5, %v775
        %v777 = vsub.f32 1.5, %v776
        %v778 = vmul.f32 %v773, %v777
        %vm779 = vweird.f32 %v765
        %vm780 = vweird.f32 %v773
        %vm781 = vmor %vm779, %vm780
        %v782 = vsel %vm781, %v773, %v778
        %v783 = vrsqrt.pop %v766
        %v784 = vmul.f32 %v783, %v766
        %v785 = vmul.f32 %v784, %v783
        %v786 = vmul.f32 0.5, %v785
        %v787 = vsub.f32 1.5, %v786
        %v788 = vmul.f32 %v783, %v787
        %vm789 = vweird.f32 %v766
        %vm790 = vweird.f32 %v783
        %vm791 = vmor %vm789, %vm790
        %v792 = vsel %vm791, %v783, %v788
        %v793 = vrsqrt.pop %v767
        %v794 = vmul.f32 %v793, %v767
        %v795 = vmul.f32 %v794, %v793
        %v796 = vmul.f32 0.5, %v795
        %v797 = vsub.f32 1.5, %v796
        %v798 = vmul.f32 %v793, %v797
        %vm799 = vweird.f32 %v767
        %vm800 = vweird.f32 %v793
        %vm801 = vmor %vm799, %vm800
        %v802 = vsel %vm801, %v793, %v798
        %v803 = vrsqrt.pop %v768
        %v804 = vmul.f32 %v803, %v768
        %v805 = vmul.f32 %v804, %v803
        %v806 = vmul.f32 0.5, %v805
        %v807 = vsub.f32 1.5, %v806
        %v808 = vmul.f32 %v803, %v807
        %vm809 = vweird.f32 %v768
        %vm810 = vweird.f32 %v803
        %vm811 = vmor %vm809, %vm810
        %v812 = vsel %vm811, %v803, %v808
        %v813 = vrsqrt.pop %v769
        %v814 = vmul.f32 %v813, %v769
        %v815 = vmul.f32 %v814, %v813
        %v816 = vmul.f32 0.5, %v815
        %v817 = vsub.f32 1.5, %v816
        %v818 = vmul.f32 %v813, %v817
        %vm819 = vweird.f32 %v769
        %vm820 = vweird.f32 %v813
        %vm821 = vmor %vm819, %vm820
        %v822 = vsel %vm821, %v813, %v818
        %v823 = vrsqrt.pop %v770
        %v824 = vmul.f32 %v823, %v770
        %v825 = vmul.f32 %v824, %v823
        %v826 = vmul.f32 0.5, %v825
        %v827 = vsub.f32 1.5, %v826
        %v828 = vmul.f32 %v823, %v827
        %vm829 = vweird.f32 %v770
        %vm830 = vweird.f32 %v823
        %vm831 = vmor %vm829, %vm830
        %v832 = vsel %vm831, %v823, %v828
        %v833 = vrsqrt.pop %v771
        %v834 = vmul.f32 %v833, %v771
        %v835 = vmul.f32 %v834, %v833
        %v836 = vmul.f32 0.5, %v835
        %v837 = vsub.f32 1.5, %v836
        %v838 = vmul.f32 %v833, %v837
        %vm839 = vweird.f32 %v771
        %vm840 = vweird.f32 %v833
        %vm841 = vmor %vm839, %vm840
        %v842 = vsel %vm841, %v833, %v838
        %v843 = vrsqrt.pop %v772
        %v844 = vmul.f32 %v843, %v772
        %v845 = vmul.f32 %v844, %v843
        %v846 = vmul.f32 0.5, %v845
        %v847 = vsub.f32 1.5, %v846
        %v848 = vmul.f32 %v843, %v847
        %vm849 = vweird.f32 %v772
        %vm850 = vweird.f32 %v843
        %vm851 = vmor %vm849, %vm850
        %v852 = vsel %vm851, %v843, %v848
        %v853 = vmul.f32 %v693, %v782
        %v854 = vmul.f32 %v694, %v792
        %v855 = vmul.f32 %v695, %v802
        %v856 = vmul.f32 %v696, %v812
        %v857 = vmul.f32 %v697, %v822
        %v858 = vmul.f32 %v698, %v832
        %v859 = vmul.f32 %v699, %v842
        %v860 = vmul.f32 %v700, %v852
        %v865 = vperm.slane %v626, 0
        %v866 = vperm.slane %v626, 4
        %v867 = vperm.slane %v627, 0
        %v868 = vperm.slane %v627, 4
        %v869 = vperm.slane %v628, 0
        %v870 = vperm.slane %v628, 4
        %v871 = vperm.slane %v629, 0
        %v872 = vperm.slane %v629, 4
        %v881 = vperm.slane %v865, 0
        %v882 = vperm.slane %v866, 0
        %v883 = vperm.slane %v867, 0
        %v884 = vperm.slane %v868, 0
        %v885 = vperm.slane %v869, 0
        %v886 = vperm.slane %v870, 0
        %v887 = vperm.slane %v871, 0
        %v888 = vperm.slane %v872, 0
        %v889 = vmul.f32 %v853, %v881
        %v890 = vmul.f32 %v854, %v882
        %v891 = vmul.f32 %v855, %v883
        %v892 = vmul.f32 %v856, %v884
        %v893 = vmul.f32 %v857, %v885
        %v894 = vmul.f32 %v858, %v886
        %v895 = vmul.f32 %v859, %v887
        %v896 = vmul.f32 %v860, %v888
        %v897 = vperm.slane %v626, 1
        %v898 = vperm.slane %v626, 5
        %v899 = vperm.slane %v627, 1
        %v900 = vperm.slane %v627, 5
        %v901 = vperm.slane %v628, 1
        %v902 = vperm.slane %v628, 5
        %v903 = vperm.slane %v629, 1
        %v904 = vperm.slane %v629, 5
        %v913 = vperm.slane %v897, 1
        %v914 = vperm.slane %v898, 1
        %v915 = vperm.slane %v899, 1
        %v916 = vperm.slane %v900, 1
        %v917 = vperm.slane %v901, 1
        %v918 = vperm.slane %v902, 1
        %v919 = vperm.slane %v903, 1
        %v920 = vperm.slane %v904, 1
        %v921 = vadd.f32 %v889, %v913
        %v922 = vadd.f32 %v890, %v914
        %v923 = vadd.f32 %v891, %v915
        %v924 = vadd.f32 %v892, %v916
        %v925 = vadd.f32 %v893, %v917
        %v926 = vadd.f32 %v894, %v918
        %v927 = vadd.f32 %v895, %v919
        %v928 = vadd.f32 %v896, %v920
        %v929 = vmax.f32 %v921, 0.0
        %v930 = vmax.f32 %v922, 0.0
        %v931 = vmax.f32 %v923, 0.0
        %v932 = vmax.f32 %v924, 0.0
        %v933 = vmax.f32 %v925, 0.0
        %v934 = vmax.f32 %v926, 0.0
        %v935 = vmax.f32 %v927, 0.0
        %v936 = vmax.f32 %v928, 0.0
        %v937 = vpack.c.bf16 %v929, %v929
        %v938 = vpack.c.bf16 %v930, %v930
        %v939 = vpack.c.bf16 %v931, %v931
        %v940 = vpack.c.bf16 %v932, %v932
        %v941 = vpack.c.bf16 %v933, %v933
        %v942 = vpack.c.bf16 %v934, %v934
        %v943 = vpack.c.bf16 %v935, %v935
        %v944 = vpack.c.bf16 %v936, %v936
        %v945 = vld [vmem:[%s3] sm:$0xf]
        %v946 = vld [vmem:[%s3 + $0x4] sm:$0xf]
        %v947 = vld [vmem:[%s3 + $0x8] sm:$0xf]
        %v948 = vld [vmem:[%s3 + $0xc] sm:$0xf]
        %v949 = vld [vmem:[%s3 + $0x10] sm:$0xf]
        %v950 = vld [vmem:[%s3 + $0x14] sm:$0xf]
        %v951 = vld [vmem:[%s3 + $0x18] sm:$0xf]
        %v952 = vld [vmem:[%s3 + $0x1c] sm:$0xf]
        %v953 = vld [vmem:[%s3 + $0x20] sm:$0xf]
        %v954 = vld [vmem:[%s3 + $0x24] sm:$0xf]
        %v955 = vld [vmem:[%s3 + $0x28] sm:$0xf]
        %v956 = vld [vmem:[%s3 + $0x2c] sm:$0xf]
        %v957 = vld [vmem:[%s3 + $0x30] sm:$0xf]
        %v958 = vld [vmem:[%s3 + $0x34] sm:$0xf]
        %v959 = vld [vmem:[%s3 + $0x38] sm:$0xf]
        %v960 = vld [vmem:[%s3 + $0x3c] sm:$0xf]
        %v961 = vld [vmem:[%s3 + $0x40] sm:$0xf]
        %v962 = vld [vmem:[%s3 + $0x44] sm:$0xf]
        %v963 = vld [vmem:[%s3 + $0x48] sm:$0xf]
        %v964 = vld [vmem:[%s3 + $0x4c] sm:$0xf]
        %v965 = vld [vmem:[%s3 + $0x50] sm:$0xf]
        %v966 = vld [vmem:[%s3 + $0x54] sm:$0xf]
        %v967 = vld [vmem:[%s3 + $0x58] sm:$0xf]
        %v968 = vld [vmem:[%s3 + $0x5c] sm:$0xf]
        %v969 = vld [vmem:[%s3 + $0x60] sm:$0xf]
        %v970 = vld [vmem:[%s3 + $0x64] sm:$0xf]
        %v971 = vld [vmem:[%s3 + $0x68] sm:$0xf]
        %v972 = vld [vmem:[%s3 + $0x6c] sm:$0xf]
        %v973 = vld [vmem:[%s3 + $0x70] sm:$0xf]
        %v974 = vld [vmem:[%s3 + $0x74] sm:$0xf]
        %v975 = vld [vmem:[%s3 + $0x78] sm:$0xf]
        %v976 = vld [vmem:[%s3 + $0x7c] sm:$0xf]
        %v977 = vld [vmem:[%s3 + $0x80] sm:$0xf]
        %v978 = vld [vmem:[%s3 + $0x84] sm:$0xf]
        %v979 = vld [vmem:[%s3 + $0x88] sm:$0xf]
        %v980 = vld [vmem:[%s3 + $0x8c] sm:$0xf]
        %v981 = vld [vmem:[%s3 + $0x90] sm:$0xf]
        %v982 = vld [vmem:[%s3 + $0x94] sm:$0xf]
        %v983 = vld [vmem:[%s3 + $0x98] sm:$0xf]
        %v984 = vld [vmem:[%s3 + $0x9c] sm:$0xf]
        %v985 = vld [vmem:[%s3 + $0xa0] sm:$0xf]
        %v986 = vld [vmem:[%s3 + $0xa4] sm:$0xf]
        %v987 = vld [vmem:[%s3 + $0xa8] sm:$0xf]
        %v988 = vld [vmem:[%s3 + $0xac] sm:$0xf]
        %v989 = vld [vmem:[%s3 + $0xb0] sm:$0xf]
        %v990 = vld [vmem:[%s3 + $0xb4] sm:$0xf]
        %v991 = vld [vmem:[%s3 + $0xb8] sm:$0xf]
        %v992 = vld [vmem:[%s3 + $0xbc] sm:$0xf]
        %v993 = vld [vmem:[%s3 + $0xc0] sm:$0xf]
        %v994 = vld [vmem:[%s3 + $0xc4] sm:$0xf]
        %v995 = vld [vmem:[%s3 + $0xc8] sm:$0xf]
        %v996 = vld [vmem:[%s3 + $0xcc] sm:$0xf]
        %v997 = vld [vmem:[%s3 + $0xd0] sm:$0xf]
        %v998 = vld [vmem:[%s3 + $0xd4] sm:$0xf]
        %v999 = vld [vmem:[%s3 + $0xd8] sm:$0xf]
        %v1000 = vld [vmem:[%s3 + $0xdc] sm:$0xf]
        %v1001 = vld [vmem:[%s3 + $0xe0] sm:$0xf]
        %v1002 = vld [vmem:[%s3 + $0xe4] sm:$0xf]
        %v1003 = vld [vmem:[%s3 + $0xe8] sm:$0xf]
        %v1004 = vld [vmem:[%s3 + $0xec] sm:$0xf]
        %v1005 = vld [vmem:[%s3 + $0xf0] sm:$0xf]
        %v1006 = vld [vmem:[%s3 + $0xf4] sm:$0xf]
        %v1007 = vld [vmem:[%s3 + $0xf8] sm:$0xf]
        %v1008 = vld [vmem:[%s3 + $0xfc] sm:$0xf]
        %v1009 = vld [vmem:[%s3 + $0x100] sm:$0xf]
        %v1010 = vld [vmem:[%s3 + $0x104] sm:$0xf]
        %v1011 = vld [vmem:[%s3 + $0x108] sm:$0xf]
        %v1012 = vld [vmem:[%s3 + $0x10c] sm:$0xf]
        %v1013 = vld [vmem:[%s3 + $0x110] sm:$0xf]
        %v1014 = vld [vmem:[%s3 + $0x114] sm:$0xf]
        %v1015 = vld [vmem:[%s3 + $0x118] sm:$0xf]
        %v1016 = vld [vmem:[%s3 + $0x11c] sm:$0xf]
        %v1017 = vld [vmem:[%s3 + $0x120] sm:$0xf]
        %v1018 = vld [vmem:[%s3 + $0x124] sm:$0xf]
        %v1019 = vld [vmem:[%s3 + $0x128] sm:$0xf]
        %v1020 = vld [vmem:[%s3 + $0x12c] sm:$0xf]
        %v1021 = vld [vmem:[%s3 + $0x130] sm:$0xf]
        %v1022 = vld [vmem:[%s3 + $0x134] sm:$0xf]
        %v1023 = vld [vmem:[%s3 + $0x138] sm:$0xf]
        %v1024 = vld [vmem:[%s3 + $0x13c] sm:$0xf]
        %v1025 = vld [vmem:[%s3 + $0x140] sm:$0xf]
        %v1026 = vld [vmem:[%s3 + $0x144] sm:$0xf]
        %v1027 = vld [vmem:[%s3 + $0x148] sm:$0xf]
        %v1028 = vld [vmem:[%s3 + $0x14c] sm:$0xf]
        %v1029 = vld [vmem:[%s3 + $0x150] sm:$0xf]
        %v1030 = vld [vmem:[%s3 + $0x154] sm:$0xf]
        %v1031 = vld [vmem:[%s3 + $0x158] sm:$0xf]
        %v1032 = vld [vmem:[%s3 + $0x15c] sm:$0xf]
        %v1033 = vld [vmem:[%s3 + $0x160] sm:$0xf]
        %v1034 = vld [vmem:[%s3 + $0x164] sm:$0xf]
        %v1035 = vld [vmem:[%s3 + $0x168] sm:$0xf]
        %v1036 = vld [vmem:[%s3 + $0x16c] sm:$0xf]
        %v1037 = vld [vmem:[%s3 + $0x170] sm:$0xf]
        %v1038 = vld [vmem:[%s3 + $0x174] sm:$0xf]
        %v1039 = vld [vmem:[%s3 + $0x178] sm:$0xf]
        %v1040 = vld [vmem:[%s3 + $0x17c] sm:$0xf]
        %v1041 = vld [vmem:[%s3 + $0x180] sm:$0xf]
        %v1042 = vld [vmem:[%s3 + $0x184] sm:$0xf]
        %v1043 = vld [vmem:[%s3 + $0x188] sm:$0xf]
        %v1044 = vld [vmem:[%s3 + $0x18c] sm:$0xf]
        %v1045 = vld [vmem:[%s3 + $0x190] sm:$0xf]
        %v1046 = vld [vmem:[%s3 + $0x194] sm:$0xf]
        %v1047 = vld [vmem:[%s3 + $0x198] sm:$0xf]
        %v1048 = vld [vmem:[%s3 + $0x19c] sm:$0xf]
        %v1049 = vld [vmem:[%s3 + $0x1a0] sm:$0xf]
        %v1050 = vld [vmem:[%s3 + $0x1a4] sm:$0xf]
        %v1051 = vld [vmem:[%s3 + $0x1a8] sm:$0xf]
        %v1052 = vld [vmem:[%s3 + $0x1ac] sm:$0xf]
        %v1053 = vld [vmem:[%s3 + $0x1b0] sm:$0xf]
        %v1054 = vld [vmem:[%s3 + $0x1b4] sm:$0xf]
        %v1055 = vld [vmem:[%s3 + $0x1b8] sm:$0xf]
        %v1056 = vld [vmem:[%s3 + $0x1bc] sm:$0xf]
        %v1057 = vld [vmem:[%s3 + $0x1c0] sm:$0xf]
        %v1058 = vld [vmem:[%s3 + $0x1c4] sm:$0xf]
        %v1059 = vld [vmem:[%s3 + $0x1c8] sm:$0xf]
        %v1060 = vld [vmem:[%s3 + $0x1cc] sm:$0xf]
        %v1061 = vld [vmem:[%s3 + $0x1d0] sm:$0xf]
        %v1062 = vld [vmem:[%s3 + $0x1d4] sm:$0xf]
        %v1063 = vld [vmem:[%s3 + $0x1d8] sm:$0xf]
        %v1064 = vld [vmem:[%s3 + $0x1dc] sm:$0xf]
        %v1065 = vld [vmem:[%s3 + $0x1e0] sm:$0xf]
        %v1066 = vld [vmem:[%s3 + $0x1e4] sm:$0xf]
        %v1067 = vld [vmem:[%s3 + $0x1e8] sm:$0xf]
        %v1068 = vld [vmem:[%s3 + $0x1ec] sm:$0xf]
        %v1069 = vld [vmem:[%s3 + $0x1f0] sm:$0xf]
        %v1070 = vld [vmem:[%s3 + $0x1f4] sm:$0xf]
        %v1071 = vld [vmem:[%s3 + $0x1f8] sm:$0xf]
        %v1072 = vld [vmem:[%s3 + $0x1fc] sm:$0xf]
        %v1073 = vperm.slane %v626, 2
        %v1202 = vunpack.c.l.b16 %v945
        %v1203 = vunpack.c.l.b16 %v946
        %v1204 = vunpack.c.l.b16 %v947
        %v1205 = vunpack.c.l.b16 %v948
        %v1206 = vunpack.c.l.b16 %v949
        %v1207 = vunpack.c.l.b16 %v950
        %v1208 = vunpack.c.l.b16 %v951
        %v1209 = vunpack.c.l.b16 %v952
        %v1210 = vunpack.c.l.b16 %v953
        %v1211 = vunpack.c.l.b16 %v954
        %v1212 = vunpack.c.l.b16 %v955
        %v1213 = vunpack.c.l.b16 %v956
        %v1214 = vunpack.c.l.b16 %v957
        %v1215 = vunpack.c.l.b16 %v958
        %v1216 = vunpack.c.l.b16 %v959
        %v1217 = vunpack.c.l.b16 %v960
        %v1218 = vunpack.c.l.b16 %v961
        %v1219 = vunpack.c.l.b16 %v962
        %v1220 = vunpack.c.l.b16 %v963
        %v1221 = vunpack.c.l.b16 %v964
        %v1222 = vunpack.c.l.b16 %v965
        %v1223 = vunpack.c.l.b16 %v966
        %v1224 = vunpack.c.l.b16 %v967
        %v1225 = vunpack.c.l.b16 %v968
        %v1226 = vunpack.c.l.b16 %v969
        %v1227 = vunpack.c.l.b16 %v970
        %v1228 = vunpack.c.l.b16 %v971
        %v1229 = vunpack.c.l.b16 %v972
        %v1230 = vunpack.c.l.b16 %v973
        %v1231 = vunpack.c.l.b16 %v974
        %v1232 = vunpack.c.l.b16 %v975
        %v1233 = vunpack.c.l.b16 %v976
        %v1234 = vunpack.c.l.b16 %v977
        %v1235 = vunpack.c.l.b16 %v978
        %v1236 = vunpack.c.l.b16 %v979
        %v1237 = vunpack.c.l.b16 %v980
        %v1238 = vunpack.c.l.b16 %v981
        %v1239 = vunpack.c.l.b16 %v982
        %v1240 = vunpack.c.l.b16 %v983
        %v1241 = vunpack.c.l.b16 %v984
        %v1242 = vunpack.c.l.b16 %v985
        %v1243 = vunpack.c.l.b16 %v986
        %v1244 = vunpack.c.l.b16 %v987
        %v1245 = vunpack.c.l.b16 %v988
        %v1246 = vunpack.c.l.b16 %v989
        %v1247 = vunpack.c.l.b16 %v990
        %v1248 = vunpack.c.l.b16 %v991
        %v1249 = vunpack.c.l.b16 %v992
        %v1250 = vunpack.c.l.b16 %v993
        %v1251 = vunpack.c.l.b16 %v994
        %v1252 = vunpack.c.l.b16 %v995
        %v1253 = vunpack.c.l.b16 %v996
        %v1254 = vunpack.c.l.b16 %v997
        %v1255 = vunpack.c.l.b16 %v998
        %v1256 = vunpack.c.l.b16 %v999
        %v1257 = vunpack.c.l.b16 %v1000
        %v1258 = vunpack.c.l.b16 %v1001
        %v1259 = vunpack.c.l.b16 %v1002
        %v1260 = vunpack.c.l.b16 %v1003
        %v1261 = vunpack.c.l.b16 %v1004
        %v1262 = vunpack.c.l.b16 %v1005
        %v1263 = vunpack.c.l.b16 %v1006
        %v1264 = vunpack.c.l.b16 %v1007
        %v1265 = vunpack.c.l.b16 %v1008
        %v1266 = vunpack.c.l.b16 %v1009
        %v1267 = vunpack.c.l.b16 %v1010
        %v1268 = vunpack.c.l.b16 %v1011
        %v1269 = vunpack.c.l.b16 %v1012
        %v1270 = vunpack.c.l.b16 %v1013
        %v1271 = vunpack.c.l.b16 %v1014
        %v1272 = vunpack.c.l.b16 %v1015
        %v1273 = vunpack.c.l.b16 %v1016
        %v1274 = vunpack.c.l.b16 %v1017
        %v1275 = vunpack.c.l.b16 %v1018
        %v1276 = vunpack.c.l.b16 %v1019
        %v1277 = vunpack.c.l.b16 %v1020
        %v1278 = vunpack.c.l.b16 %v1021
        %v1279 = vunpack.c.l.b16 %v1022
        %v1280 = vunpack.c.l.b16 %v1023
        %v1281 = vunpack.c.l.b16 %v1024
        %v1282 = vunpack.c.l.b16 %v1025
        %v1283 = vunpack.c.l.b16 %v1026
        %v1284 = vunpack.c.l.b16 %v1027
        %v1285 = vunpack.c.l.b16 %v1028
        %v1286 = vunpack.c.l.b16 %v1029
        %v1287 = vunpack.c.l.b16 %v1030
        %v1288 = vunpack.c.l.b16 %v1031
        %v1289 = vunpack.c.l.b16 %v1032
        %v1290 = vunpack.c.l.b16 %v1033
        %v1291 = vunpack.c.l.b16 %v1034
        %v1292 = vunpack.c.l.b16 %v1035
        %v1293 = vunpack.c.l.b16 %v1036
        %v1294 = vunpack.c.l.b16 %v1037
        %v1295 = vunpack.c.l.b16 %v1038
        %v1296 = vunpack.c.l.b16 %v1039
        %v1297 = vunpack.c.l.b16 %v1040
        %v1298 = vunpack.c.l.b16 %v1041
        %v1299 = vunpack.c.l.b16 %v1042
        %v1300 = vunpack.c.l.b16 %v1043
        %v1301 = vunpack.c.l.b16 %v1044
        %v1302 = vunpack.c.l.b16 %v1045
        %v1303 = vunpack.c.l.b16 %v1046
        %v1304 = vunpack.c.l.b16 %v1047
        %v1305 = vunpack.c.l.b16 %v1048
        %v1306 = vunpack.c.l.b16 %v1049
        %v1307 = vunpack.c.l.b16 %v1050
        %v1308 = vunpack.c.l.b16 %v1051
        %v1309 = vunpack.c.l.b16 %v1052
        %v1310 = vunpack.c.l.b16 %v1053
        %v1311 = vunpack.c.l.b16 %v1054
        %v1312 = vunpack.c.l.b16 %v1055
        %v1313 = vunpack.c.l.b16 %v1056
        %v1314 = vunpack.c.l.b16 %v1057
        %v1315 = vunpack.c.l.b16 %v1058
        %v1316 = vunpack.c.l.b16 %v1059
        %v1317 = vunpack.c.l.b16 %v1060
        %v1318 = vunpack.c.l.b16 %v1061
        %v1319 = vunpack.c.l.b16 %v1062
        %v1320 = vunpack.c.l.b16 %v1063
        %v1321 = vunpack.c.l.b16 %v1064
        %v1322 = vunpack.c.l.b16 %v1065
        %v1323 = vunpack.c.l.b16 %v1066
        %v1324 = vunpack.c.l.b16 %v1067
        %v1325 = vunpack.c.l.b16 %v1068
        %v1326 = vunpack.c.l.b16 %v1069
        %v1327 = vunpack.c.l.b16 %v1070
        %v1328 = vunpack.c.l.b16 %v1071
        %v1329 = vunpack.c.l.b16 %v1072
        %v1330 = vpack.c.b16 %v1203, %v1202
        %v1331 = vpack.c.b16 %v1205, %v1204
        %v1332 = vpack.c.b16 %v1207, %v1206
        %v1333 = vpack.c.b16 %v1209, %v1208
        %v1334 = vpack.c.b16 %v1211, %v1210
        %v1335 = vpack.c.b16 %v1213, %v1212
        %v1336 = vpack.c.b16 %v1215, %v1214
        %v1337 = vpack.c.b16 %v1217, %v1216
        %v1338 = vpack.c.b16 %v1219, %v1218
        %v1339 = vpack.c.b16 %v1221, %v1220
        %v1340 = vpack.c.b16 %v1223, %v1222
        %v1341 = vpack.c.b16 %v1225, %v1224
        %v1342 = vpack.c.b16 %v1227, %v1226
        %v1343 = vpack.c.b16 %v1229, %v1228
        %v1344 = vpack.c.b16 %v1231, %v1230
        %v1345 = vpack.c.b16 %v1233, %v1232
        %v1346 = vpack.c.b16 %v1235, %v1234
        %v1347 = vpack.c.b16 %v1237, %v1236
        %v1348 = vpack.c.b16 %v1239, %v1238
        %v1349 = vpack.c.b16 %v1241, %v1240
        %v1350 = vpack.c.b16 %v1243, %v1242
        %v1351 = vpack.c.b16 %v1245, %v1244
        %v1352 = vpack.c.b16 %v1247, %v1246
        %v1353 = vpack.c.b16 %v1249, %v1248
        %v1354 = vpack.c.b16 %v1251, %v1250
        %v1355 = vpack.c.b16 %v1253, %v1252
        %v1356 = vpack.c.b16 %v1255, %v1254
        %v1357 = vpack.c.b16 %v1257, %v1256
        %v1358 = vpack.c.b16 %v1259, %v1258
        %v1359 = vpack.c.b16 %v1261, %v1260
        %v1360 = vpack.c.b16 %v1263, %v1262
        %v1361 = vpack.c.b16 %v1265, %v1264
        %v1362 = vpack.c.b16 %v1267, %v1266
        %v1363 = vpack.c.b16 %v1269, %v1268
        %v1364 = vpack.c.b16 %v1271, %v1270
        %v1365 = vpack.c.b16 %v1273, %v1272
        %v1366 = vpack.c.b16 %v1275, %v1274
        %v1367 = vpack.c.b16 %v1277, %v1276
        %v1368 = vpack.c.b16 %v1279, %v1278
        %v1369 = vpack.c.b16 %v1281, %v1280
        %v1370 = vpack.c.b16 %v1283, %v1282
        %v1371 = vpack.c.b16 %v1285, %v1284
        %v1372 = vpack.c.b16 %v1287, %v1286
        %v1373 = vpack.c.b16 %v1289, %v1288
        %v1374 = vpack.c.b16 %v1291, %v1290
        %v1375 = vpack.c.b16 %v1293, %v1292
        %v1376 = vpack.c.b16 %v1295, %v1294
        %v1377 = vpack.c.b16 %v1297, %v1296
        %v1378 = vpack.c.b16 %v1299, %v1298
        %v1379 = vpack.c.b16 %v1301, %v1300
        %v1380 = vpack.c.b16 %v1303, %v1302
        %v1381 = vpack.c.b16 %v1305, %v1304
        %v1382 = vpack.c.b16 %v1307, %v1306
        %v1383 = vpack.c.b16 %v1309, %v1308
        %v1384 = vpack.c.b16 %v1311, %v1310
        %v1385 = vpack.c.b16 %v1313, %v1312
        %v1386 = vpack.c.b16 %v1315, %v1314
        %v1387 = vpack.c.b16 %v1317, %v1316
        %v1388 = vpack.c.b16 %v1319, %v1318
        %v1389 = vpack.c.b16 %v1321, %v1320
        %v1390 = vpack.c.b16 %v1323, %v1322
        %v1391 = vpack.c.b16 %v1325, %v1324
        %v1392 = vpack.c.b16 %v1327, %v1326
        %v1393 = vpack.c.b16 %v1329, %v1328
        %1458 = vmatpush.bf16.msra.mxu0 %v1337
        %1459 = vmatpush.bf16.msra.mxu0 %v1336
        %1460 = vmatpush.bf16.msra.mxu0 %v1335
        %1461 = vmatpush.bf16.msra.mxu0 %v1334
        %1462 = vmatpush.bf16.msra.mxu0 %v1333
        %1463 = vmatpush.bf16.msra.mxu0 %v1332
        %1464 = vmatpush.bf16.msra.mxu0 %v1331
        %1465 = vmatpush.bf16.msra.mxu0 %v1330
        %1466 = vmatmul.bf16.gmra.mxu0 %v937
        %v1467 = vpop.f32.mrf.mxu0
        %v1468 = vadd.f32 %v1073, %v1467
        %v1469 = vpop.f32.mrf.mxu0
        %1470 = vdwg.mxu0
        %1471 = vmatpush.bf16.msra.mxu0 %v1345
        %1472 = vmatpush.bf16.msra.mxu0 %v1344
        %1473 = vmatpush.bf16.msra.mxu0 %v1343
        %1474 = vmatpush.bf16.msra.mxu0 %v1342
        %1475 = vmatpush.bf16.msra.mxu0 %v1341
        %1476 = vmatpush.bf16.msra.mxu0 %v1340
        %1477 = vmatpush.bf16.msra.mxu0 %v1339
        %1478 = vmatpush.bf16.msra.mxu0 %v1338
        %1479 = vmatmul.bf16.gmra.mxu0 %v938
        %v1480 = vpop.f32.mrf.mxu0
        %v1481 = vadd.f32 %v1468, %v1480
        %v1482 = vpop.f32.mrf.mxu0
        %1483 = vdwg.mxu0
        %1484 = vmatpush.bf16.msra.mxu0 %v1353
        %1485 = vmatpush.bf16.msra.mxu0 %v1352
        %1486 = vmatpush.bf16.msra.mxu0 %v1351
        %1487 = vmatpush.bf16.msra.mxu0 %v1350
        %1488 = vmatpush.bf16.msra.mxu0 %v1349
        %1489 = vmatpush.bf16.msra.mxu0 %v1348
        %1490 = vmatpush.bf16.msra.mxu0 %v1347
        %1491 = vmatpush.bf16.msra.mxu0 %v1346
        %1492 = vmatmul.bf16.gmra.mxu0 %v939
        %v1493 = vpop.f32.mrf.mxu0
        %v1494 = vadd.f32 %v1481, %v1493
        %v1495 = vpop.f32.mrf.mxu0
        %1496 = vdwg.mxu0
        %1497 = vmatpush.bf16.msra.mxu0 %v1361
        %1498 = vmatpush.bf16.msra.mxu0 %v1360
        %1499 = vmatpush.bf16.msra.mxu0 %v1359
        %1500 = vmatpush.bf16.msra.mxu0 %v1358
        %1501 = vmatpush.bf16.msra.mxu0 %v1357
        %1502 = vmatpush.bf16.msra.mxu0 %v1356
        %1503 = vmatpush.bf16.msra.mxu0 %v1355
        %1504 = vmatpush.bf16.msra.mxu0 %v1354
        %1505 = vmatmul.bf16.gmra.mxu0 %v940
        %v1506 = vpop.f32.mrf.mxu0
        %v1507 = vadd.f32 %v1494, %v1506
        %v1508 = vpop.f32.mrf.mxu0
        %1509 = vdwg.mxu0
        %1510 = vmatpush.bf16.msra.mxu0 %v1369
        %1511 = vmatpush.bf16.msra.mxu0 %v1368
        %1512 = vmatpush.bf16.msra.mxu0 %v1367
        %1513 = vmatpush.bf16.msra.mxu0 %v1366
        %1514 = vmatpush.bf16.msra.mxu0 %v1365
        %1515 = vmatpush.bf16.msra.mxu0 %v1364
        %1516 = vmatpush.bf16.msra.mxu0 %v1363
        %1517 = vmatpush.bf16.msra.mxu0 %v1362
        %1518 = vmatmul.bf16.gmra.mxu0 %v941
        %v1519 = vpop.f32.mrf.mxu0
        %v1520 = vadd.f32 %v1507, %v1519
        %v1521 = vpop.f32.mrf.mxu0
        %1522 = vdwg.mxu0
        %1523 = vmatpush.bf16.msra.mxu0 %v1377
        %1524 = vmatpush.bf16.msra.mxu0 %v1376
        %1525 = vmatpush.bf16.msra.mxu0 %v1375
        %1526 = vmatpush.bf16.msra.mxu0 %v1374
        %1527 = vmatpush.bf16.msra.mxu0 %v1373
        %1528 = vmatpush.bf16.msra.mxu0 %v1372
        %1529 = vmatpush.bf16.msra.mxu0 %v1371
        %1530 = vmatpush.bf16.msra.mxu0 %v1370
        %1531 = vmatmul.bf16.gmra.mxu0 %v942
        %v1532 = vpop.f32.mrf.mxu0
        %v1533 = vadd.f32 %v1520, %v1532
        %v1534 = vpop.f32.mrf.mxu0
        %1535 = vdwg.mxu0
        %1536 = vmatpush.bf16.msra.mxu0 %v1385
        %1537 = vmatpush.bf16.msra.mxu0 %v1384
        %1538 = vmatpush.bf16.msra.mxu0 %v1383
        %1539 = vmatpush.bf16.msra.mxu0 %v1382
        %1540 = vmatpush.bf16.msra.mxu0 %v1381
        %1541 = vmatpush.bf16.msra.mxu0 %v1380
        %1542 = vmatpush.bf16.msra.mxu0 %v1379
        %1543 = vmatpush.bf16.msra.mxu0 %v1378
        %1544 = vmatmul.bf16.gmra.mxu0 %v943
        %v1545 = vpop.f32.mrf.mxu0
        %v1546 = vadd.f32 %v1533, %v1545
        %v1547 = vpop.f32.mrf.mxu0
        %1548 = vdwg.mxu0
        %1549 = vmatpush.bf16.msra.mxu0 %v1393
        %1550 = vmatpush.bf16.msra.mxu0 %v1392
        %1551 = vmatpush.bf16.msra.mxu0 %v1391
        %1552 = vmatpush.bf16.msra.mxu0 %v1390
        %1553 = vmatpush.bf16.msra.mxu0 %v1389
        %1554 = vmatpush.bf16.msra.mxu0 %v1388
        %1555 = vmatpush.bf16.msra.mxu0 %v1387
        %1556 = vmatpush.bf16.msra.mxu0 %v1386
        %1557 = vmatmul.bf16.gmra.mxu0 %v944
        %v1558 = vpop.f32.mrf.mxu0
        %v1559 = vadd.f32 %v1546, %v1558
        %v1560 = vpop.f32.mrf.mxu0
        %1561 = vdwg.mxu0
        %1562 = vst [vmem:[%s208] sm:$0xff] %v1559
        %s1563 = sand.u32 %s116, 1
        %s1564 = scalar_lea.sflag [#allocation4], %s1563
        %s1565 = sand.u32 %s116, 1
        %s1566 = smul.addr %s1565, 8
        %s1567 = scalar_lea.vmem [#allocation5], %s1566
        // Predicated region
        $region41: #{fasttext_char_forward.1} parent=35 // pred_check
          %p1568 = pneg %p126
        $region42: #{fasttext_char_forward.1} parent=35 // pred_check_branch
          %1570 = sbr.rel (%p1568) target = $region44
        $region43: #{fasttext_char_forward.1} parent=35 // pred_region
          %1572 = vsyncadd %s1564, 0
          %s1573 = smul.addr %s19, 8
          %s1574 = scalar_lea.hbm %s4, %s1573
          %s1576 = sshll.u32 %s1567, 4
          %s1577 = int_to_ptr.vmem [resolvable:$true] %s1576
          %s1578 = sshll.u32 %s1574, 4
          %s1579 = int_to_ptr.hbm [resolvable:$true] %s1578
          %1581 = dma.vmem_to_hbm [thread:$0]  %s1577, 128, %s1579, %s1564
        $region44: #{fasttext_char_forward.1} parent=35 // pred_fallthru
          _
      $region36: #{fasttext_char_forward.1} parent=5 // pred_fallthru
        _
      %p1582 = scmp.le.s32.totalorder 2, %s14
      // Predicated region
      $region45: #{fasttext_char_forward.1} parent=5 // pred_check
        %p1583 = pneg %p1582
      $region46: #{fasttext_char_forward.1} parent=5 // pred_check_branch
        %1585 = sbr.rel (%p1583) target = $region48
      $region47: #{fasttext_char_forward.1} parent=5 // pred_region
        %s1586 = ssub.s32 %s14, 2
        // Predicated region
        $region49: #{fasttext_char_forward.1} parent=47 // pred_check
          %p1587 = pneg %p132
        $region50: #{fasttext_char_forward.1} parent=47 // pred_check_branch
          %1589 = sbr.rel (%p1587) target = $region52
        $region51: #{fasttext_char_forward.1} parent=47 // pred_region
          %s1590 = sand.u32 %s117, 1
          %s1591 = scalar_lea.sflag [#allocation4], %s1590
          %s1592 = sand.u32 %s117, 1
          %s1593 = smul.addr %s1592, 8
          %s1594 = scalar_lea.vmem [#allocation5], %s1593
          %1596 = dma.done %s1591, 128
        $region52: #{fasttext_char_forward.1} parent=47 // pred_fallthru
          _
      $region48: #{fasttext_char_forward.1} parent=5 // pred_fallthru
        _
    $region6: #{fasttext_char_forward.1} parent=1 // loop_footer
      %s18 = sadd.s32 1, %s14
    $region7: #{fasttext_char_forward.1} parent=1 // loop_footer_branch
      %13 = sbr.rel target = $region3
    $region8: #{fasttext_char_forward.1} parent=1 // loop_exit
      _
    %1597 = vsyncpa [#allocation3], 1
    %s1598 = scalar_lea.sflag [#allocation3], 1
    %1599 = vsyncpa %s1598, 1
    %1600 = vsyncpa [#allocation4], 1
    %s1601 = scalar_lea.sflag [#allocation4], 1
    %1602 = vsyncpa %s1601, 1

</llo_original>
